<compile_context>
chip_gen: v5e
topology: v5e:2x2
jax: 0.10.0
libtpu: 0.0.40
codegen_flags: <defaults>
</compile_context>

<pallas_src>
import jax
import jax.numpy as jnp
from jax.experimental import pallas as pl
from jax.experimental.pallas import tpu as pltpu


NUM_CLASSES = 11
LANE = 128      # f32 lane width: feature / logit dims padded to multiples of this
TB = 8          # batch tile per grid step (f32 sublane count); use 128+ for real batches


# ---------------------------------------------------------------------------
# Fused Pallas kernel: in-kernel mean-pool + folded 3-layer classification head
# ---------------------------------------------------------------------------

def _fused_model_kernel(xp_ref, w1_ref, b1_ref, w2_ref, b2_ref, w3_ref, b3_ref, o_ref):
    """Fused forward for one batch tile.

    xp_ref: [TB, Np, Kp] f32   patchified image tile (Kp = lane-padded C*P*P)
    w1_ref: [Kp, 256]  bf16    folded (patch-embed @ linear1) weight
    b1_ref: [1, 256]   f32     folded bias
    w2_ref: [256, 128] bf16    b2_ref: [1, 128] f32
    w3_ref: [128, LANE] bf16   b3_ref: [1, LANE] f32  (zero-padded past num_classes)
    o_ref:  [TB, LANE] f32     lane-dense padded logits
    """
    npatches = xp_ref.shape[1]
    # Global mean pool over patches: sublane-axis reduction (XLU slot, ~free).
    xm = jnp.sum(xp_ref[...], axis=1) * (1.0 / npatches)                 # [TB, Kp] f32

    # Folded patch-embed + Linear(D,256); bf16 MXU inputs, f32 accumulation.
    h1 = jnp.dot(xm.astype(jnp.bfloat16), w1_ref[...],
                 preferred_element_type=jnp.float32) + b1_ref[...]       # [TB, 256]
    h1 = jnp.maximum(h1, 0.0)                                            # ReLU (f32 VPU)

    h2 = jnp.dot(h1.astype(jnp.bfloat16), w2_ref[...],
                 preferred_element_type=jnp.float32) + b2_ref[...]       # [TB, 128]
    h2 = jnp.maximum(h2, 0.0)

    # Dropout = identity (eval mode).  Final linear, lane-dense padded output store.
    o_ref[...] = jnp.dot(h2.astype(jnp.bfloat16), w3_ref[...],
                         preferred_element_type=jnp.float32) + b3_ref[...]  # [TB, LANE]


def fused_forward(xp, params):
    """xp: [Bp, Np, Kp] padded patchified images. Returns padded logits [Bp, LANE]."""
    Bp, Np, Kp = xp.shape
    assert Bp % TB == 0
    H1 = params["w1"].shape[1]          # 256
    H2 = params["w2"].shape[1]          # 128
    OUT = params["w3"].shape[1]         # LANE

    return pl.pallas_call(
        _fused_model_kernel,
        out_shape=jax.ShapeDtypeStruct((Bp, OUT), jnp.float32),
        grid=(Bp // TB,),
        in_specs=[
            pl.BlockSpec((TB, Np, Kp), lambda i: (i, 0, 0)),   # batch-tiled input
            pl.BlockSpec((Kp, H1), lambda i: (0, 0)),          # weights: constant
            pl.BlockSpec((1, H1), lambda i: (0, 0)),           #   index_maps => stay
            pl.BlockSpec((H1, H2), lambda i: (0, 0)),          #   VMEM-resident
            pl.BlockSpec((1, H2), lambda i: (0, 0)),
            pl.BlockSpec((H2, OUT), lambda i: (0, 0)),
            pl.BlockSpec((1, OUT), lambda i: (0, 0)),
        ],
        out_specs=pl.BlockSpec((TB, OUT), lambda i: (i, 0)),
        compiler_params=pltpu.CompilerParams(
            dimension_semantics=("parallel",)),                # v7x: 2 TCs split batch
    )(xp, params["w1"], params["b1"], params["w2"], params["b2"],
      params["w3"], params["b3"])


# ---------------------------------------------------------------------------
# Parameters (torch nn.Linear default init), with exact offline folds / paddings
# ---------------------------------------------------------------------------

def init_params(key, in_channels, patch, visual_output_dim, num_classes):
    ks = jax.random.split(key, 8)
    K = in_channels * patch * patch
    D = visual_output_dim

    def dense(kw, kb, fan_in, fan_out):
        lim = float(fan_in) ** -0.5
        w = jax.random.uniform(kw, (fan_in, fan_out), jnp.float32, -lim, lim)
        b = jax.random.uniform(kb, (1, fan_out), jnp.float32, -lim, lim)
        return w, b

    w_patch, b_patch = dense(ks[0], ks[1], K, D)     # linear patch-embed stub
    w1, b1 = dense(ks[2], ks[3], D, 256)
    w2, b2 = dense(ks[4], ks[5], 256, 128)
    w3, b3 = dense(ks[6], ks[7], 128, num_classes)

    # (1) Fold patch-embed into linear1 (no nonlinearity between them) -- exact.
    w1_eff = w_patch @ w1                            # [K, 256]
    b1_eff = b_patch @ w1 + b1                       # [1, 256]

    # (2) Lane-pad K -> multiple of 128 with zero rows (input cols also zero) -- exact.
    Kp = ((K + LANE - 1) // LANE) * LANE
    w1_eff = jnp.pad(w1_eff, ((0, Kp - K), (0, 0)))

    # (3) Lane-pad logits -> 128 zero columns (sliced off outside) -- exact.
    w3 = jnp.pad(w3, ((0, 0), (0, LANE - num_classes)))
    b3 = jnp.pad(b3, ((0, 0), (0, LANE - num_classes)))

    # (4) bf16 weights; biases stay f32 (bias/ReLU math runs in f32 post-accumulation).
    return dict(
        w1=w1_eff.astype(jnp.bfloat16), b1=b1_eff,
        w2=w2.astype(jnp.bfloat16), b2=b2,
        w3=w3.astype(jnp.bfloat16), b3=b3,
    )


# ---------------------------------------------------------------------------
# Model wrapper
# ---------------------------------------------------------------------------

def custom_model_forward(params, x, patch):
    """x: [B, C, H, W] (NCHW, like PyTorch). Returns [B, num_classes] logits."""
    B, C, H, W = x.shape
    Hp, Wp = H // patch, W // patch
    Np, K = Hp * Wp, C * patch * patch
    Kp = params["w1"].shape[0]
    Bp = ((B + TB - 1) // TB) * TB                   # sublane-aligned batch

    # Patchify (pure layout glue in XLA); zero-pad batch + feature dims (exact).
    p = x.reshape(B, C, Hp, patch, Wp, patch)
    p = p.transpose(0, 2, 4, 1, 3, 5).reshape(B, Np, K)
    p = jnp.pad(p, ((0, Bp - B), (0, 0), (0, Kp - K)))

    logits_pad = fused_forward(p, params)            # [Bp, LANE]
    return logits_pad[:B, :NUM_CLASSES]


# ---------------------------------------------------------------------------
# Main
# ---------------------------------------------------------------------------

if __name__ == "__main__":
    visual_output_dim = 32   # TODO(synk): placeholder vs MUSK-large's real feature width
    patch = 4
    B, C, H, W = 2, 3, 16, 16

    key = jax.random.PRNGKey(0)
    k_param, k_x = jax.random.split(key)
    params = init_params(k_param, C, patch, visual_output_dim, NUM_CLASSES)
    x = jax.random.normal(k_x, (B, C, H, W), jnp.float32)

    forward = jax.jit(custom_model_forward, static_argnames=("patch",))
    out = forward(params, x, patch=patch)
    out = jax.block_until_ready(out)

    assert out.shape == (B, NUM_CLASSES), out.shape
    assert bool(jnp.all(jnp.isfinite(out)))
    print("KERNEL_OK")
</pallas_src>

<mosaic_0001>
module attributes {stable_mosaic.version = 11 : i64} {
  func.func @_fused_model_kernel(%arg0: i32, %arg1: memref<8x16x128xf32, #tpu.memory_space<vmem>>, %arg2: memref<128x256xbf16, #tpu.memory_space<vmem>>, %arg3: memref<1x256xf32, #tpu.memory_space<vmem>>, %arg4: memref<256x128xbf16, #tpu.memory_space<vmem>>, %arg5: memref<1x128xf32, #tpu.memory_space<vmem>>, %arg6: memref<128x128xbf16, #tpu.memory_space<vmem>>, %arg7: memref<1x128xf32, #tpu.memory_space<vmem>>, %arg8: memref<8x128xf32, #tpu.memory_space<vmem>>) attributes {dimension_semantics = [#tpu.dimension_semantics<parallel>], iteration_bounds = array<i64: 1>, scalar_prefetch = 0 : i64, scratch_operands = 0 : i64, tpu.core_type = #tpu.core_type<tc>, window_params = [{transform_indices = @transform_0, window_bounds = array<i64: 8, 16, 128>}, {pipeline_mode = #tpu.pipeline_mode<synchronous>, transform_indices = @transform_1, window_bounds = array<i64: 128, 256>}, {pipeline_mode = #tpu.pipeline_mode<synchronous>, transform_indices = @transform_2, window_bounds = array<i64: 1, 256>}, {pipeline_mode = #tpu.pipeline_mode<synchronous>, transform_indices = @transform_3, window_bounds = array<i64: 256, 128>}, {pipeline_mode = #tpu.pipeline_mode<synchronous>, transform_indices = @transform_4, window_bounds = array<i64: 1, 128>}, {pipeline_mode = #tpu.pipeline_mode<synchronous>, transform_indices = @transform_5, window_bounds = array<i64: 128, 128>}, {pipeline_mode = #tpu.pipeline_mode<synchronous>, transform_indices = @transform_6, window_bounds = array<i64: 1, 128>}, {transform_indices = @transform_7, window_bounds = array<i64: 8, 128>}]} {
    %c0 = arith.constant 0 : index
    %c0_0 = arith.constant 0 : index
    %c0_1 = arith.constant 0 : index
    %0 = vector.load %arg1[%c0, %c0_0, %c0_1] : memref<8x16x128xf32, #tpu.memory_space<vmem>>, vector<8x16x128xf32>
    %cst = arith.constant dense<0.000000e+00> : vector<8x128xf32>
    %1 = vector.multi_reduction <add>, %0, %cst [1] : vector<8x16x128xf32> to vector<8x128xf32>
    %cst_2 = arith.constant 6.250000e-02 : f32
    %2 = vector.broadcast %cst_2 : f32 to vector<8x128xf32>
    %3 = arith.mulf %1, %2 : vector<8x128xf32>
    %4 = arith.truncf %3 : vector<8x128xf32> to vector<8x128xbf16>
    %c0_3 = arith.constant 0 : index
    %c0_4 = arith.constant 0 : index
    %5 = vector.load %arg2[%c0_3, %c0_4] : memref<128x256xbf16, #tpu.memory_space<vmem>>, vector<128x256xbf16>
    %cst_5 = arith.constant dense<0.000000e+00> : vector<8x256xf32>
    %6 = tpu.matmul %4, %5, %cst_5 {dimension_numbers = #tpu.dot_dimension_numbers<[1], [0], [0], [1], [0, 0, 1, 1], [], []>} : vector<8x128xbf16>, vector<128x256xbf16>, vector<8x256xf32> -> vector<8x256xf32>
    %c0_6 = arith.constant 0 : index
    %c0_7 = arith.constant 0 : index
    %7 = vector.load %arg3[%c0_6, %c0_7] : memref<1x256xf32, #tpu.memory_space<vmem>>, vector<1x256xf32>
    %8 = vector.broadcast %7 : vector<1x256xf32> to vector<8x256xf32>
    %9 = arith.addf %6, %8 : vector<8x256xf32>
    %cst_8 = arith.constant 0.000000e+00 : f32
    %10 = vector.broadcast %cst_8 : f32 to vector<8x256xf32>
    %11 = arith.maximumf %9, %10 : vector<8x256xf32>
    %12 = arith.truncf %11 : vector<8x256xf32> to vector<8x256xbf16>
    %c0_9 = arith.constant 0 : index
    %c0_10 = arith.constant 0 : index
    %13 = vector.load %arg4[%c0_9, %c0_10] : memref<256x128xbf16, #tpu.memory_space<vmem>>, vector<256x128xbf16>
    %cst_11 = arith.constant dense<0.000000e+00> : vector<8x128xf32>
    %14 = tpu.matmul %12, %13, %cst_11 {dimension_numbers = #tpu.dot_dimension_numbers<[1], [0], [0], [1], [0, 0, 1, 1], [], []>} : vector<8x256xbf16>, vector<256x128xbf16>, vector<8x128xf32> -> vector<8x128xf32>
    %c0_12 = arith.constant 0 : index
    %c0_13 = arith.constant 0 : index
    %15 = vector.load %arg5[%c0_12, %c0_13] : memref<1x128xf32, #tpu.memory_space<vmem>>, vector<1x128xf32>
    %16 = vector.broadcast %15 : vector<1x128xf32> to vector<8x128xf32>
    %17 = arith.addf %14, %16 : vector<8x128xf32>
    %cst_14 = arith.constant 0.000000e+00 : f32
    %18 = vector.broadcast %cst_14 : f32 to vector<8x128xf32>
    %19 = arith.maximumf %17, %18 : vector<8x128xf32>
    %20 = arith.truncf %19 : vector<8x128xf32> to vector<8x128xbf16>
    %c0_15 = arith.constant 0 : index
    %c0_16 = arith.constant 0 : index
    %21 = vector.load %arg6[%c0_15, %c0_16] : memref<128x128xbf16, #tpu.memory_space<vmem>>, vector<128x128xbf16>
    %cst_17 = arith.constant dense<0.000000e+00> : vector<8x128xf32>
    %22 = tpu.matmul %20, %21, %cst_17 {dimension_numbers = #tpu.dot_dimension_numbers<[1], [0], [0], [1], [0, 0, 1, 1], [], []>} : vector<8x128xbf16>, vector<128x128xbf16>, vector<8x128xf32> -> vector<8x128xf32>
    %c0_18 = arith.constant 0 : index
    %c0_19 = arith.constant 0 : index
    %23 = vector.load %arg7[%c0_18, %c0_19] : memref<1x128xf32, #tpu.memory_space<vmem>>, vector<1x128xf32>
    %24 = vector.broadcast %23 : vector<1x128xf32> to vector<8x128xf32>
    %25 = arith.addf %22, %24 : vector<8x128xf32>
    %c0_20 = arith.constant 0 : index
    %c0_21 = arith.constant 0 : index
    %26 = vector.load %arg8[%c0_20, %c0_21] : memref<8x128xf32, #tpu.memory_space<vmem>>, vector<8x128xf32>
    tpu.vector_store %arg8[%c0_20, %c0_21], %25 {strides = array<i32>} : memref<8x128xf32, #tpu.memory_space<vmem>>, vector<8x128xf32>,
    return
  }
  func.func @transform_0(%arg0: i32) -> (i32, i32, i32) {
    %c0_i32 = arith.constant 0 : i32
    %c0_i32_0 = arith.constant 0 : i32
    %c0_i32_1 = arith.constant 0 : i32
    return %arg0, %c0_i32, %c0_i32_0 : i32, i32, i32
  }
  func.func @transform_1(%arg0: i32) -> (i32, i32) {
    %c0_i32 = arith.constant 0 : i32
    %c0_i32_0 = arith.constant 0 : i32
    %c0_i32_1 = arith.constant 0 : i32
    return %c0_i32, %c0_i32_0 : i32, i32
  }
  func.func @transform_2(%arg0: i32) -> (i32, i32) {
    %c0_i32 = arith.constant 0 : i32
    %c0_i32_0 = arith.constant 0 : i32
    %c0_i32_1 = arith.constant 0 : i32
    return %c0_i32, %c0_i32_0 : i32, i32
  }
  func.func @transform_3(%arg0: i32) -> (i32, i32) {
    %c0_i32 = arith.constant 0 : i32
    %c0_i32_0 = arith.constant 0 : i32
    %c0_i32_1 = arith.constant 0 : i32
    return %c0_i32, %c0_i32_0 : i32, i32
  }
  func.func @transform_4(%arg0: i32) -> (i32, i32) {
    %c0_i32 = arith.constant 0 : i32
    %c0_i32_0 = arith.constant 0 : i32
    %c0_i32_1 = arith.constant 0 : i32
    return %c0_i32, %c0_i32_0 : i32, i32
  }
  func.func @transform_5(%arg0: i32) -> (i32, i32) {
    %c0_i32 = arith.constant 0 : i32
    %c0_i32_0 = arith.constant 0 : i32
    %c0_i32_1 = arith.constant 0 : i32
    return %c0_i32, %c0_i32_0 : i32, i32
  }
  func.func @transform_6(%arg0: i32) -> (i32, i32) {
    %c0_i32 = arith.constant 0 : i32
    %c0_i32_0 = arith.constant 0 : i32
    %c0_i32_1 = arith.constant 0 : i32
    return %c0_i32, %c0_i32_0 : i32, i32
  }
  func.func @transform_7(%arg0: i32) -> (i32, i32) {
    %c0_i32 = arith.constant 0 : i32
    %c0_i32_0 = arith.constant 0 : i32
    return %arg0, %c0_i32 : i32, i32
  }
}

</mosaic_0001>

<llo_original>
// kernel: custom_model_forward.1
$region0: #{custom_model_forward.1}
  #allocation0 [shape = 'u32[]', space=smem, size = 0x4, offset = 0x4, fixed_abs, tag = 'smem constant byte address 0x4 - core index']
  #allocation1 [shape = 'u32[72,128]{1,0:T(1,128)}', space=vmem, size = 0x9000, scoped, tag = 'internal scratch']
  %s0 = inlined_call_operand.vmem [shape: f32[8,16,128], index: 0, kind: input, shape index: {}]
  %s1 = inlined_call_operand.vmem [shape: bf16[128,256], index: 1, kind: input, shape index: {}]
  %s2 = inlined_call_operand.vmem [shape: f32[1,256], index: 2, kind: input, shape index: {}]
  %s3 = inlined_call_operand.vmem [shape: bf16[256,128], index: 3, kind: input, shape index: {}]
  %s4 = inlined_call_operand.vmem [shape: f32[1,128], index: 4, kind: input, shape index: {}]
  %s5 = inlined_call_operand.vmem [shape: bf16[128,128], index: 5, kind: input, shape index: {}]
  %s6 = inlined_call_operand.vmem [shape: f32[1,128], index: 6, kind: input, shape index: {}]
  %s7 = inlined_call_operand.vmem [shape: f32[8,128], index: 7, kind: output, shape index: {}]
  %s8 = sld [smem:[#allocation0]]
  $region38: #{custom_model_forward.1} parent=0
    _
  %s10 = ssub.s32 1, %s8
  %s11 = scalar_select 0, %s10, %s8
  // Predicated region
  $region2: #{custom_model_forward.1} parent=0 // pred_check
    _
  $region3: #{custom_model_forward.1} parent=0 // pred_check_branch
    %13 = sbr.rel (0) target = $region5
  $region4: #{custom_model_forward.1} parent=0 // pred_region
    _
  $region5: #{custom_model_forward.1} parent=0 // pred_fallthru
    _
  // Predicated region
  $region6: #{custom_model_forward.1} parent=0 // pred_check
    _
  $region7: #{custom_model_forward.1} parent=0 // pred_check_branch
    %15 = sbr.rel (0) target = $region9
  $region8: #{custom_model_forward.1} parent=0 // pred_region
    _
  $region9: #{custom_model_forward.1} parent=0 // pred_fallthru
    _
  // Predicated region
  $region10: #{custom_model_forward.1} parent=0 // pred_check
    _
  $region11: #{custom_model_forward.1} parent=0 // pred_check_branch
    %17 = sbr.rel (0) target = $region13
  $region12: #{custom_model_forward.1} parent=0 // pred_region
    _
  $region13: #{custom_model_forward.1} parent=0 // pred_fallthru
    _
  // Predicated region
  $region14: #{custom_model_forward.1} parent=0 // pred_check
    _
  $region15: #{custom_model_forward.1} parent=0 // pred_check_branch
    %19 = sbr.rel (0) target = $region17
  $region16: #{custom_model_forward.1} parent=0 // pred_region
    _
  $region17: #{custom_model_forward.1} parent=0 // pred_fallthru
    _
  // Predicated region
  $region18: #{custom_model_forward.1} parent=0 // pred_check
    _
  $region19: #{custom_model_forward.1} parent=0 // pred_check_branch
    %21 = sbr.rel (0) target = $region21
  $region20: #{custom_model_forward.1} parent=0 // pred_region
    _
  $region21: #{custom_model_forward.1} parent=0 // pred_fallthru
    _
  // Predicated region
  $region22: #{custom_model_forward.1} parent=0 // pred_check
    _
  $region23: #{custom_model_forward.1} parent=0 // pred_check_branch
    %23 = sbr.rel (0) target = $region25
  $region24: #{custom_model_forward.1} parent=0 // pred_region
    _
  $region25: #{custom_model_forward.1} parent=0 // pred_fallthru
    _
  // Predicated region
  $region26: #{custom_model_forward.1} parent=0 // pred_check
    _
  $region27: #{custom_model_forward.1} parent=0 // pred_check_branch
    %25 = sbr.rel (0) target = $region29
  $region28: #{custom_model_forward.1} parent=0 // pred_region
    _
  $region29: #{custom_model_forward.1} parent=0 // pred_fallthru
    _
  %v26 = vld [vmem:[%s0] sm:$0xff]
  %v27 = vld [vmem:[%s0 + $0x8] sm:$0xff]
  %v28 = vld [vmem:[%s0 + $0x10] sm:$0xff]
  %v29 = vld [vmem:[%s0 + $0x18] sm:$0xff]
  %v30 = vld [vmem:[%s0 + $0x20] sm:$0xff]
  %v31 = vld [vmem:[%s0 + $0x28] sm:$0xff]
  %v32 = vld [vmem:[%s0 + $0x30] sm:$0xff]
  %v33 = vld [vmem:[%s0 + $0x38] sm:$0xff]
  %v34 = vld [vmem:[%s0 + $0x40] sm:$0xff]
  %v35 = vld [vmem:[%s0 + $0x48] sm:$0xff]
  %v36 = vld [vmem:[%s0 + $0x50] sm:$0xff]
  %v37 = vld [vmem:[%s0 + $0x58] sm:$0xff]
  %v38 = vld [vmem:[%s0 + $0x60] sm:$0xff]
  %v39 = vld [vmem:[%s0 + $0x68] sm:$0xff]
  %v40 = vld [vmem:[%s0 + $0x70] sm:$0xff]
  %v41 = vld [vmem:[%s0 + $0x78] sm:$0xff]
  %v42 = vadd.f32 %v26, %v27
  %v43 = vrot.slane %v42, 4
  %v44 = vadd.f32 %v42, %v43
  %v45 = vrot.slane %v44, 2
  %v46 = vadd.f32 %v44, %v45
  %v47 = vrot.slane %v46, 1
  %v48 = vadd.f32 %v46, %v47
  %v49 = vadd.f32 %v28, %v29
  %v50 = vrot.slane %v49, 4
  %v51 = vadd.f32 %v49, %v50
  %v52 = vrot.slane %v51, 2
  %v53 = vadd.f32 %v51, %v52
  %v54 = vrot.slane %v53, 1
  %v55 = vadd.f32 %v53, %v54
  %v56 = vadd.f32 %v30, %v31
  %v57 = vrot.slane %v56, 4
  %v58 = vadd.f32 %v56, %v57
  %v59 = vrot.slane %v58, 2
  %v60 = vadd.f32 %v58, %v59
  %v61 = vrot.slane %v60, 1
  %v62 = vadd.f32 %v60, %v61
  %v63 = vadd.f32 %v32, %v33
  %v64 = vrot.slane %v63, 4
  %v65 = vadd.f32 %v63, %v64
  %v66 = vrot.slane %v65, 2
  %v67 = vadd.f32 %v65, %v66
  %v68 = vrot.slane %v67, 1
  %v69 = vadd.f32 %v67, %v68
  %v70 = vadd.f32 %v34, %v35
  %v71 = vrot.slane %v70, 4
  %v72 = vadd.f32 %v70, %v71
  %v73 = vrot.slane %v72, 2
  %v74 = vadd.f32 %v72, %v73
  %v75 = vrot.slane %v74, 1
  %v76 = vadd.f32 %v74, %v75
  %v77 = vadd.f32 %v36, %v37
  %v78 = vrot.slane %v77, 4
  %v79 = vadd.f32 %v77, %v78
  %v80 = vrot.slane %v79, 2
  %v81 = vadd.f32 %v79, %v80
  %v82 = vrot.slane %v81, 1
  %v83 = vadd.f32 %v81, %v82
  %v84 = vadd.f32 %v38, %v39
  %v85 = vrot.slane %v84, 4
  %v86 = vadd.f32 %v84, %v85
  %v87 = vrot.slane %v86, 2
  %v88 = vadd.f32 %v86, %v87
  %v89 = vrot.slane %v88, 1
  %v90 = vadd.f32 %v88, %v89
  %v91 = vadd.f32 %v40, %v41
  %v92 = vrot.slane %v91, 4
  %v93 = vadd.f32 %v91, %v92
  %v94 = vrot.slane %v93, 2
  %v95 = vadd.f32 %v93, %v94
  %v96 = vrot.slane %v95, 1
  %v97 = vadd.f32 %v95, %v96
  %v98 = vmul.f32 %v48, 0.0625
  %v99 = vmul.f32 %v55, 0.0625
  %v100 = vmul.f32 %v62, 0.0625
  %v101 = vmul.f32 %v69, 0.0625
  %v102 = vmul.f32 %v76, 0.0625
  %v103 = vmul.f32 %v83, 0.0625
  %v104 = vmul.f32 %v90, 0.0625
  %v105 = vmul.f32 %v97, 0.0625
  %v106 = vpack.c.bf16 %v98, %v98
  %v107 = vpack.c.bf16 %v99, %v99
  %v108 = vpack.c.bf16 %v100, %v100
  %v109 = vpack.c.bf16 %v101, %v101
  %v110 = vpack.c.bf16 %v102, %v102
  %v111 = vpack.c.bf16 %v103, %v103
  %v112 = vpack.c.bf16 %v104, %v104
  %v113 = vpack.c.bf16 %v105, %v105
  %v114 = vld [vmem:[%s1] sm:$0xff]
  %v115 = vld [vmem:[%s1 + $0x8] sm:$0xff]
  %v116 = vld [vmem:[%s1 + $0x10] sm:$0xff]
  %v117 = vld [vmem:[%s1 + $0x18] sm:$0xff]
  %v118 = vld [vmem:[%s1 + $0x20] sm:$0xff]
  %v119 = vld [vmem:[%s1 + $0x28] sm:$0xff]
  %v120 = vld [vmem:[%s1 + $0x30] sm:$0xff]
  %v121 = vld [vmem:[%s1 + $0x38] sm:$0xff]
  %v122 = vld [vmem:[%s1 + $0x40] sm:$0xff]
  %v123 = vld [vmem:[%s1 + $0x48] sm:$0xff]
  %v124 = vld [vmem:[%s1 + $0x50] sm:$0xff]
  %v125 = vld [vmem:[%s1 + $0x58] sm:$0xff]
  %v126 = vld [vmem:[%s1 + $0x60] sm:$0xff]
  %v127 = vld [vmem:[%s1 + $0x68] sm:$0xff]
  %v128 = vld [vmem:[%s1 + $0x70] sm:$0xff]
  %v129 = vld [vmem:[%s1 + $0x78] sm:$0xff]
  %v130 = vld [vmem:[%s2] sm:$0x3]
  %v132 = vperm.slane %v130, 0
  %v133 = vperm.slane %v130, 1
  %v144 = vunpack.c.l.b16 %v106
  %v145 = vunpack.c.l.b16 %v107
  %v146 = vunpack.c.l.b16 %v108
  %v147 = vunpack.c.l.b16 %v109
  %v148 = vunpack.c.l.b16 %v110
  %v149 = vunpack.c.l.b16 %v111
  %v150 = vunpack.c.l.b16 %v112
  %v151 = vunpack.c.l.b16 %v113
  %vm152 = vcmask 1041409
  %v153 = vsel %vm152, %v145, %v144
  %vm154 = vcmask 1042434
  %v155 = vsel %vm154, %v146, %v153
  %vm156 = vcmask 1043459
  %v157 = vsel %vm156, %v147, %v155
  %vm158 = vcmask 1044484
  %v159 = vsel %vm158, %v148, %v157
  %vm160 = vcmask 1045509
  %v161 = vsel %vm160, %v149, %v159
  %vm162 = vcmask 1046534
  %v163 = vsel %vm162, %v150, %v161
  %vm164 = vcmask 1047559
  %v165 = vsel %vm164, %v151, %v163
  %v166 = vpack.c.b16 %v165, %v165
  %v184 = vunpack.c.l.b16 %v114
  %v185 = vunpack.c.h.b16 %v114
  %v186 = vunpack.c.l.b16 %v115
  %v187 = vunpack.c.h.b16 %v115
  %v188 = vunpack.c.l.b16 %v116
  %v189 = vunpack.c.h.b16 %v116
  %v190 = vunpack.c.l.b16 %v117
  %v191 = vunpack.c.h.b16 %v117
  %v192 = vunpack.c.l.b16 %v118
  %v193 = vunpack.c.h.b16 %v118
  %v194 = vunpack.c.l.b16 %v119
  %v195 = vunpack.c.h.b16 %v119
  %v196 = vunpack.c.l.b16 %v120
  %v197 = vunpack.c.h.b16 %v120
  %v198 = vunpack.c.l.b16 %v121
  %v199 = vunpack.c.h.b16 %v121
  %v200 = vunpack.c.l.b16 %v122
  %v201 = vunpack.c.h.b16 %v122
  %v202 = vunpack.c.l.b16 %v123
  %v203 = vunpack.c.h.b16 %v123
  %v204 = vunpack.c.l.b16 %v124
  %v205 = vunpack.c.h.b16 %v124
  %v206 = vunpack.c.l.b16 %v125
  %v207 = vunpack.c.h.b16 %v125
  %v208 = vunpack.c.l.b16 %v126
  %v209 = vunpack.c.h.b16 %v126
  %v210 = vunpack.c.l.b16 %v127
  %v211 = vunpack.c.h.b16 %v127
  %v212 = vunpack.c.l.b16 %v128
  %v213 = vunpack.c.h.b16 %v128
  %v214 = vunpack.c.l.b16 %v129
  %v215 = vunpack.c.h.b16 %v129
  %v216 = vpack.c.b16 %v186, %v184
  %v217 = vpack.c.b16 %v187, %v185
  %v218 = vpack.c.b16 %v190, %v188
  %v219 = vpack.c.b16 %v191, %v189
  %v220 = vpack.c.b16 %v194, %v192
  %v221 = vpack.c.b16 %v195, %v193
  %v222 = vpack.c.b16 %v198, %v196
  %v223 = vpack.c.b16 %v199, %v197
  %v224 = vpack.c.b16 %v202, %v200
  %v225 = vpack.c.b16 %v203, %v201
  %v226 = vpack.c.b16 %v206, %v204
  %v227 = vpack.c.b16 %v207, %v205
  %v228 = vpack.c.b16 %v210, %v208
  %v229 = vpack.c.b16 %v211, %v209
  %v230 = vpack.c.b16 %v214, %v212
  %v231 = vpack.c.b16 %v215, %v213
  %248 = vmatpush.bf16.msra.mxu0 %v230
  %249 = vmatpush.bf16.msra.mxu0 %v228
  %250 = vmatpush.bf16.msra.mxu0 %v226
  %251 = vmatpush.bf16.msra.mxu0 %v224
  %252 = vmatpush.bf16.msra.mxu0 %v222
  %253 = vmatpush.bf16.msra.mxu0 %v220
  %254 = vmatpush.bf16.msra.mxu0 %v218
  %255 = vmatpush.bf16.msra.mxu0 %v216
  %256 = vmatmul.bf16.gmra.mxu0 %v166
  %v257 = vpop.f32.mrf.mxu0
  %v258 = vadd.f32 %v132, %v257
  %v259 = vpop.f32.mrf.mxu0
  %260 = vdwg.mxu0
  %261 = vmatpush.bf16.msra.mxu0 %v231
  %262 = vmatpush.bf16.msra.mxu0 %v229
  %263 = vmatpush.bf16.msra.mxu0 %v227
  %264 = vmatpush.bf16.msra.mxu0 %v225
  %265 = vmatpush.bf16.msra.mxu0 %v223
  %266 = vmatpush.bf16.msra.mxu0 %v221
  %267 = vmatpush.bf16.msra.mxu0 %v219
  %268 = vmatpush.bf16.msra.mxu0 %v217
  %269 = vmatmul.bf16.gmra.mxu0 %v166
  %v270 = vpop.f32.mrf.mxu0
  %v271 = vadd.f32 %v133, %v270
  %v272 = vpop.f32.mrf.mxu0
  %273 = vdwg.mxu0
  %v274 = vmax.f32 %v258, 0.0
  %v275 = vmax.f32 %v271, 0.0
  %v276 = vpack.c.bf16 %v274, %v274
  %v277 = vpack.c.bf16 %v275, %v275
  %v278 = vld [vmem:[%s3] sm:$0xf]
  %v279 = vld [vmem:[%s3 + $0x4] sm:$0xf]
  %v280 = vld [vmem:[%s3 + $0x8] sm:$0xf]
  %v281 = vld [vmem:[%s3 + $0xc] sm:$0xf]
  %v282 = vld [vmem:[%s3 + $0x10] sm:$0xf]
  %v283 = vld [vmem:[%s3 + $0x14] sm:$0xf]
  %v284 = vld [vmem:[%s3 + $0x18] sm:$0xf]
  %v285 = vld [vmem:[%s3 + $0x1c] sm:$0xf]
  %v286 = vld [vmem:[%s3 + $0x20] sm:$0xf]
  %v287 = vld [vmem:[%s3 + $0x24] sm:$0xf]
  %v288 = vld [vmem:[%s3 + $0x28] sm:$0xf]
  %v289 = vld [vmem:[%s3 + $0x2c] sm:$0xf]
  %v290 = vld [vmem:[%s3 + $0x30] sm:$0xf]
  %v291 = vld [vmem:[%s3 + $0x34] sm:$0xf]
  %v292 = vld [vmem:[%s3 + $0x38] sm:$0xf]
  %v293 = vld [vmem:[%s3 + $0x3c] sm:$0xf]
  %v294 = vld [vmem:[%s3 + $0x40] sm:$0xf]
  %v295 = vld [vmem:[%s3 + $0x44] sm:$0xf]
  %v296 = vld [vmem:[%s3 + $0x48] sm:$0xf]
  %v297 = vld [vmem:[%s3 + $0x4c] sm:$0xf]
  %v298 = vld [vmem:[%s3 + $0x50] sm:$0xf]
  %v299 = vld [vmem:[%s3 + $0x54] sm:$0xf]
  %v300 = vld [vmem:[%s3 + $0x58] sm:$0xf]
  %v301 = vld [vmem:[%s3 + $0x5c] sm:$0xf]
  %v302 = vld [vmem:[%s3 + $0x60] sm:$0xf]
  %v303 = vld [vmem:[%s3 + $0x64] sm:$0xf]
  %v304 = vld [vmem:[%s3 + $0x68] sm:$0xf]
  %v305 = vld [vmem:[%s3 + $0x6c] sm:$0xf]
  %v306 = vld [vmem:[%s3 + $0x70] sm:$0xf]
  %v307 = vld [vmem:[%s3 + $0x74] sm:$0xf]
  %v308 = vld [vmem:[%s3 + $0x78] sm:$0xf]
  %v309 = vld [vmem:[%s3 + $0x7c] sm:$0xf]
  %v310 = vld [vmem:[%s4] sm:$0x1]
  %v312 = vperm.slane %v310, 0
  %v346 = vunpack.c.l.b16 %v278
  %v347 = vunpack.c.l.b16 %v279
  %v348 = vunpack.c.l.b16 %v280
  %v349 = vunpack.c.l.b16 %v281
  %v350 = vunpack.c.l.b16 %v282
  %v351 = vunpack.c.l.b16 %v283
  %v352 = vunpack.c.l.b16 %v284
  %v353 = vunpack.c.l.b16 %v285
  %v354 = vunpack.c.l.b16 %v286
  %v355 = vunpack.c.l.b16 %v287
  %v356 = vunpack.c.l.b16 %v288
  %v357 = vunpack.c.l.b16 %v289
  %v358 = vunpack.c.l.b16 %v290
  %v359 = vunpack.c.l.b16 %v291
  %v360 = vunpack.c.l.b16 %v292
  %v361 = vunpack.c.l.b16 %v293
  %v362 = vunpack.c.l.b16 %v294
  %v363 = vunpack.c.l.b16 %v295
  %v364 = vunpack.c.l.b16 %v296
  %v365 = vunpack.c.l.b16 %v297
  %v366 = vunpack.c.l.b16 %v298
  %v367 = vunpack.c.l.b16 %v299
  %v368 = vunpack.c.l.b16 %v300
  %v369 = vunpack.c.l.b16 %v301
  %v370 = vunpack.c.l.b16 %v302
  %v371 = vunpack.c.l.b16 %v303
  %v372 = vunpack.c.l.b16 %v304
  %v373 = vunpack.c.l.b16 %v305
  %v374 = vunpack.c.l.b16 %v306
  %v375 = vunpack.c.l.b16 %v307
  %v376 = vunpack.c.l.b16 %v308
  %v377 = vunpack.c.l.b16 %v309
  %v378 = vpack.c.b16 %v347, %v346
  %v379 = vpack.c.b16 %v349, %v348
  %v380 = vpack.c.b16 %v351, %v350
  %v381 = vpack.c.b16 %v353, %v352
  %v382 = vpack.c.b16 %v355, %v354
  %v383 = vpack.c.b16 %v357, %v356
  %v384 = vpack.c.b16 %v359, %v358
  %v385 = vpack.c.b16 %v361, %v360
  %v386 = vpack.c.b16 %v363, %v362
  %v387 = vpack.c.b16 %v365, %v364
  %v388 = vpack.c.b16 %v367, %v366
  %v389 = vpack.c.b16 %v369, %v368
  %v390 = vpack.c.b16 %v371, %v370
  %v391 = vpack.c.b16 %v373, %v372
  %v392 = vpack.c.b16 %v375, %v374
  %v393 = vpack.c.b16 %v377, %v376
  %410 = vmatpush.bf16.msra.mxu0 %v385
  %411 = vmatpush.bf16.msra.mxu0 %v384
  %412 = vmatpush.bf16.msra.mxu0 %v383
  %413 = vmatpush.bf16.msra.mxu0 %v382
  %414 = vmatpush.bf16.msra.mxu0 %v381
  %415 = vmatpush.bf16.msra.mxu0 %v380
  %416 = vmatpush.bf16.msra.mxu0 %v379
  %417 = vmatpush.bf16.msra.mxu0 %v378
  %418 = vmatmul.bf16.gmra.mxu0 %v276
  %v419 = vpop.f32.mrf.mxu0
  %v420 = vadd.f32 %v312, %v419
  %v421 = vpop.f32.mrf.mxu0
  %422 = vdwg.mxu0
  %423 = vmatpush.bf16.msra.mxu0 %v393
  %424 = vmatpush.bf16.msra.mxu0 %v392
  %425 = vmatpush.bf16.msra.mxu0 %v391
  %426 = vmatpush.bf16.msra.mxu0 %v390
  %427 = vmatpush.bf16.msra.mxu0 %v389
  %428 = vmatpush.bf16.msra.mxu0 %v388
  %429 = vmatpush.bf16.msra.mxu0 %v387
  %430 = vmatpush.bf16.msra.mxu0 %v386
  %431 = vmatmul.bf16.gmra.mxu0 %v277
  %v432 = vpop.f32.mrf.mxu0
  %v433 = vadd.f32 %v420, %v432
  %v434 = vpop.f32.mrf.mxu0
  %435 = vdwg.mxu0
  %v436 = vmax.f32 %v433, 0.0
  %v437 = vpack.c.bf16 %v436, %v436
  %v438 = vld [vmem:[%s5] sm:$0xf]
  %v439 = vld [vmem:[%s5 + $0x4] sm:$0xf]
  %v440 = vld [vmem:[%s5 + $0x8] sm:$0xf]
  %v441 = vld [vmem:[%s5 + $0xc] sm:$0xf]
  %v442 = vld [vmem:[%s5 + $0x10] sm:$0xf]
  %v443 = vld [vmem:[%s5 + $0x14] sm:$0xf]
  %v444 = vld [vmem:[%s5 + $0x18] sm:$0xf]
  %v445 = vld [vmem:[%s5 + $0x1c] sm:$0xf]
  %v446 = vld [vmem:[%s5 + $0x20] sm:$0xf]
  %v447 = vld [vmem:[%s5 + $0x24] sm:$0xf]
  %v448 = vld [vmem:[%s5 + $0x28] sm:$0xf]
  %v449 = vld [vmem:[%s5 + $0x2c] sm:$0xf]
  %v450 = vld [vmem:[%s5 + $0x30] sm:$0xf]
  %v451 = vld [vmem:[%s5 + $0x34] sm:$0xf]
  %v452 = vld [vmem:[%s5 + $0x38] sm:$0xf]
  %v453 = vld [vmem:[%s5 + $0x3c] sm:$0xf]
  %v454 = vld [vmem:[%s6] sm:$0x1]
  %v456 = vperm.slane %v454, 0
  %v474 = vunpack.c.l.b16 %v438
  %v475 = vunpack.c.l.b16 %v439
  %v476 = vunpack.c.l.b16 %v440
  %v477 = vunpack.c.l.b16 %v441
  %v478 = vunpack.c.l.b16 %v442
  %v479 = vunpack.c.l.b16 %v443
  %v480 = vunpack.c.l.b16 %v444
  %v481 = vunpack.c.l.b16 %v445
  %v482 = vunpack.c.l.b16 %v446
  %v483 = vunpack.c.l.b16 %v447
  %v484 = vunpack.c.l.b16 %v448
  %v485 = vunpack.c.l.b16 %v449
  %v486 = vunpack.c.l.b16 %v450
  %v487 = vunpack.c.l.b16 %v451
  %v488 = vunpack.c.l.b16 %v452
  %v489 = vunpack.c.l.b16 %v453
  %v490 = vpack.c.b16 %v475, %v474
  %v491 = vpack.c.b16 %v477, %v476
  %v492 = vpack.c.b16 %v479, %v478
  %v493 = vpack.c.b16 %v481, %v480
  %v494 = vpack.c.b16 %v483, %v482
  %v495 = vpack.c.b16 %v485, %v484
  %v496 = vpack.c.b16 %v487, %v486
  %v497 = vpack.c.b16 %v489, %v488
  %506 = vmatpush.bf16.msra.mxu0 %v497
  %507 = vmatpush.bf16.msra.mxu0 %v496
  %508 = vmatpush.bf16.msra.mxu0 %v495
  %509 = vmatpush.bf16.msra.mxu0 %v494
  %510 = vmatpush.bf16.msra.mxu0 %v493
  %511 = vmatpush.bf16.msra.mxu0 %v492
  %512 = vmatpush.bf16.msra.mxu0 %v491
  %513 = vmatpush.bf16.msra.mxu0 %v490
  %514 = vmatmul.bf16.gmra.mxu0 %v437
  %v515 = vpop.f32.mrf.mxu0
  %v516 = vadd.f32 %v456, %v515
  %v517 = vpop.f32.mrf.mxu0
  %518 = vdwg.mxu0
  %519 = vst [vmem:[%s7] sm:$0xff] %v516
  // Predicated region
  $region30: #{custom_model_forward.1} parent=0 // pred_check
    _
  $region31: #{custom_model_forward.1} parent=0 // pred_check_branch
    %521 = sbr.rel (0) target = $region33
  $region32: #{custom_model_forward.1} parent=0 // pred_region
    _
  $region33: #{custom_model_forward.1} parent=0 // pred_fallthru
    _
  // Predicated region
  $region34: #{custom_model_forward.1} parent=0 // pred_check
    _
  $region35: #{custom_model_forward.1} parent=0 // pred_check_branch
    %523 = sbr.rel (0) target = $region37
  $region36: #{custom_model_forward.1} parent=0 // pred_region
    _
  $region37: #{custom_model_forward.1} parent=0 // pred_fallthru
    _

</llo_original>
